<compile_context>
chip_gen: v5e
topology: v5e:2x2
jax: 0.10.0
libtpu: 0.0.40
codegen_flags: <defaults>
</compile_context>

<pallas_src>
import functools

import jax
import jax.numpy as jnp
from jax.experimental import pallas as pl
from jax.experimental.pallas import tpu as pltpu

FPAD = 128      # lane-dense feature width (one vreg lane row); all F dims zero-padded to this
NPAD_MIN = 128  # node-dim padding granularity (full MXU fill)


def _round_up(v, m):
    return (v + m - 1) // m * m


def _fused_gae_kernel(a_ref, x_ref, w_ref, b_ref, o_ref, *, relus, compute_dtype):
    """All GCN layers in one kernel invocation (statically unrolled), H carried in vregs.

    a_ref: [NPAD, NPAD]      normalized adjacency (compute_dtype) — resident for all layers
    x_ref: [NPAD, FPAD]      zero-padded input features (compute_dtype)
    w_ref: [L, FPAD, FPAD]   zero-padded stacked weights (compute_dtype)
    b_ref: [L, 1, FPAD]      zero-padded stacked biases (f32)
    o_ref: [NPAD, FPAD]      output (f32)
    """
    a = a_ref[...]                              # loaded once, reused by all layers
    h = x_ref[...].astype(jnp.float32)          # SSA carry — never bounced through VMEM/HBM
    for l, relu in enumerate(relus):
        # Reference association: A_hat @ (H @ W) + b, f32 MXU accumulation throughout.
        hw = jnp.dot(h.astype(compute_dtype), w_ref[l],
                     preferred_element_type=jnp.float32)
        out = jnp.dot(a, hw.astype(compute_dtype),
                      preferred_element_type=jnp.float32)
        out = out + b_ref[l]                    # bias / ReLU kept in f32
        if relu:
            out = jnp.maximum(out, 0.0)
        h = out
    o_ref[...] = h.astype(o_ref.dtype)          # single lane-dense writeback


def make_gae_forward(a_hat, params, *, compute_dtype=jnp.bfloat16):
    """One-time prep (pad / pack / pre-cast A_hat, W, b) -> jitted forward(x) closure."""
    n = a_hat.shape[0]
    npad = max(_round_up(n, NPAD_MIN), NPAD_MIN)
    num_layers = len(params)
    relus = tuple(bool(r) for (_, _, r) in params)
    input_dim = params[0][0].shape[0]
    final_dim = params[-1][0].shape[1]

    # ---- one-time glue: zero-pad to (NPAD, FPAD)-aligned shapes and pre-cast ----------
    a_pad = jnp.zeros((npad, npad), jnp.float32).at[:n, :n].set(a_hat)
    w_stack = jnp.zeros((num_layers, FPAD, FPAD), jnp.float32)
    b_stack = jnp.zeros((num_layers, 1, FPAD), jnp.float32)
    for l, (w, b, _) in enumerate(params):
        fi, fo = w.shape
        w_stack = w_stack.at[l, :fi, :fo].set(w)
        b_stack = b_stack.at[l, 0, :fo].set(b)
    a_c = a_pad.astype(compute_dtype)
    w_c = w_stack.astype(compute_dtype)

    kernel = functools.partial(_fused_gae_kernel, relus=relus,
                               compute_dtype=compute_dtype)

    itemsize = jnp.dtype(compute_dtype).itemsize
    flops = num_layers * (2 * npad * FPAD * FPAD + 2 * npad * npad * FPAD)
    bytes_accessed = int(
        a_c.size * itemsize + npad * FPAD * itemsize
        + w_c.size * itemsize + b_stack.size * 4 + npad * FPAD * 4)

    call = pl.pallas_call(
        kernel,
        out_shape=jax.ShapeDtypeStruct((npad, FPAD), jnp.float32),
        # No grid: single invocation, every operand copied to VMEM exactly once
        # (no unused second pipeline buffer).
        in_specs=[
            pl.BlockSpec(memory_space=pltpu.MemorySpace.VMEM),  # A_hat (padded)
            pl.BlockSpec(memory_space=pltpu.MemorySpace.VMEM),  # X     (padded)
            pl.BlockSpec(memory_space=pltpu.MemorySpace.VMEM),  # W stack
            pl.BlockSpec(memory_space=pltpu.MemorySpace.VMEM),  # b stack
        ],
        out_specs=pl.BlockSpec(memory_space=pltpu.MemorySpace.VMEM),
        cost_estimate=pl.CostEstimate(
            flops=int(flops), transcendentals=0, bytes_accessed=bytes_accessed),
    )

    @jax.jit
    def forward(x):
        # Only per-call glue: pad + cast X (fuses into one small op under jit).
        x_pad = jnp.zeros((npad, FPAD), compute_dtype).at[:n, :input_dim].set(
            x.astype(compute_dtype))
        out_pad = call(a_c, x_pad, w_c, b_stack)
        return out_pad[:n, :final_dim]

    return forward


def build_normalized_adjacency(edge_index, num_nodes):
    """Dense A_hat = D^-1/2 (A + I) D^-1/2 from a (2, E) edge_index (src, dst)."""
    src, dst = edge_index[0], edge_index[1]
    a = jnp.zeros((num_nodes, num_nodes), jnp.float32)
    # scatter-ADD (not set) so duplicate edges accumulate, matching PyG message passing
    a = a.at[dst, src].add(1.0)
    a_tilde = a + jnp.eye(num_nodes, dtype=jnp.float32)
    deg = a_tilde.sum(axis=1)
    dinv = jax.lax.rsqrt(deg)
    return dinv[:, None] * a_tilde * dinv[None, :]


def glorot(key, fan_in, fan_out):
    limit = jnp.sqrt(6.0 / (fan_in + fan_out))
    return jax.random.uniform(key, (fan_in, fan_out), jnp.float32, -limit, limit)


def init_params(key, input_dim, hidden_dim, hidden_dim2, out_dim):
    """Deterministic synthetic parameters; layer order matches the PyTorch module.

    Encoder: input_dim -> hidden_dim -> hidden_dim2 -> out_dim   (ReLU, ReLU, -)
    Decoder(out_dim, hidden_dim2, hidden_dim, input_dim):
             out_dim  -> hidden_dim -> hidden_dim2 -> input_dim  (ReLU, ReLU, -)
    """
    dims = [
        (input_dim, hidden_dim), (hidden_dim, hidden_dim2), (hidden_dim2, out_dim),
        (out_dim, hidden_dim), (hidden_dim, hidden_dim2), (hidden_dim2, input_dim),
    ]
    relus = [True, True, False, True, True, False]
    params = []
    keys = jax.random.split(key, len(dims))
    for k, (fi, fo), r in zip(keys, dims, relus):
        kw, kb = jax.random.split(k)
        w = glorot(kw, fi, fo)
        b = 0.01 * jax.random.normal(kb, (fo,), jnp.float32)
        params.append((w, b, r))
    return params


def graph_autoencoder_reference(x, a_hat, params):
    h = x
    for w, b, relu in params:
        h = a_hat @ (h @ w) + b[None, :]
        if relu:
            h = jnp.maximum(h, 0.0)
    return h


if __name__ == "__main__":
    N = 32            # number of graph nodes
    INPUT_DIM = 16
    HIDDEN_DIM = 32
    HIDDEN_DIM2 = 16
    OUT_DIM = 8

    # Deterministic undirected ring graph (both edge directions present).
    idx = jnp.arange(N, dtype=jnp.int32)
    nxt = (idx + 1) % N
    src = jnp.concatenate([idx, nxt])
    dst = jnp.concatenate([nxt, idx])
    edge_index = jnp.stack([src, dst])           # (2, 2N)

    key = jax.random.PRNGKey(0)
    x = jax.random.normal(key, (N, INPUT_DIM), jnp.float32)

    a_hat = build_normalized_adjacency(edge_index, N)
    params = init_params(jax.random.PRNGKey(37), INPUT_DIM, HIDDEN_DIM, HIDDEN_DIM2, OUT_DIM)

    ref = graph_autoencoder_reference(x, a_hat, params)

    # f32 compute path (exact-ish vs reference)
    fwd_f32 = make_gae_forward(a_hat, params, compute_dtype=jnp.float32)
    out = jax.block_until_ready(fwd_f32(x))
    assert out.shape == (N, INPUT_DIM)
    assert jnp.allclose(out, ref, atol=1e-4, rtol=1e-4), "f32 Pallas output mismatch vs reference"

    # bf16 operand / f32-accumulate default path (MXU fast path on v5e/v6e/v7x)
    fwd_bf16 = make_gae_forward(a_hat, params)
    out_bf16 = jax.block_until_ready(fwd_bf16(x))
    assert out_bf16.shape == (N, INPUT_DIM)
    assert jnp.allclose(out_bf16, ref, atol=1e-1, rtol=1e-1), "bf16 Pallas output mismatch vs reference"

    print("KERNEL_OK")
</pallas_src>

<mosaic_0001>
module attributes {stable_mosaic.version = 11 : i64} {
  func.func @_fused_gae_kernel(%arg0: memref<128x128xf32, #tpu.memory_space<vmem>>, %arg1: memref<128x128xf32, #tpu.memory_space<vmem>>, %arg2: memref<6x128x128xf32, #tpu.memory_space<vmem>>, %arg3: memref<6x1x128xf32, #tpu.memory_space<vmem>>, %arg4: memref<128x128xf32, #tpu.memory_space<vmem>>) attributes {dimension_semantics = [], scalar_prefetch = 0 : i64, scratch_operands = 0 : i64, tpu.core_type = #tpu.core_type<tc>} {
    %c0 = arith.constant 0 : index
    %c0_0 = arith.constant 0 : index
    %0 = vector.load %arg0[%c0, %c0_0] : memref<128x128xf32, #tpu.memory_space<vmem>>, vector<128x128xf32>
    %c0_1 = arith.constant 0 : index
    %c0_2 = arith.constant 0 : index
    %1 = vector.load %arg1[%c0_1, %c0_2] : memref<128x128xf32, #tpu.memory_space<vmem>>, vector<128x128xf32>
    %c0_3 = arith.constant 0 : index
    %c0_4 = arith.constant 0 : index
    %c0_5 = arith.constant 0 : index
    %2 = vector.load %arg2[%c0_3, %c0_4, %c0_5] : memref<6x128x128xf32, #tpu.memory_space<vmem>>, vector<1x128x128xf32>
    %3 = vector.shape_cast %2 : vector<1x128x128xf32> to vector<128x128xf32>
    %cst = arith.constant dense<0.000000e+00> : vector<128x128xf32>
    %4 = tpu.matmul %1, %3, %cst {dimension_numbers = #tpu.dot_dimension_numbers<[1], [0], [0], [1], [0, 0, 1, 1], [], []>} : vector<128x128xf32>, vector<128x128xf32>, vector<128x128xf32> -> vector<128x128xf32>
    %cst_6 = arith.constant dense<0.000000e+00> : vector<128x128xf32>
    %5 = tpu.matmul %0, %4, %cst_6 {dimension_numbers = #tpu.dot_dimension_numbers<[1], [0], [0], [1], [0, 0, 1, 1], [], []>} : vector<128x128xf32>, vector<128x128xf32>, vector<128x128xf32> -> vector<128x128xf32>
    %c0_7 = arith.constant 0 : index
    %c0_8 = arith.constant 0 : index
    %c0_9 = arith.constant 0 : index
    %6 = vector.load %arg3[%c0_7, %c0_8, %c0_9] : memref<6x1x128xf32, #tpu.memory_space<vmem>>, vector<1x1x128xf32>
    %7 = vector.shape_cast %6 : vector<1x1x128xf32> to vector<1x128xf32>
    %8 = vector.broadcast %7 : vector<1x128xf32> to vector<128x128xf32>
    %9 = arith.addf %5, %8 : vector<128x128xf32>
    %cst_10 = arith.constant 0.000000e+00 : f32
    %10 = vector.broadcast %cst_10 : f32 to vector<128x128xf32>
    %11 = arith.maximumf %9, %10 : vector<128x128xf32>
    %c1 = arith.constant 1 : index
    %c0_11 = arith.constant 0 : index
    %c0_12 = arith.constant 0 : index
    %12 = vector.load %arg2[%c1, %c0_11, %c0_12] : memref<6x128x128xf32, #tpu.memory_space<vmem>>, vector<1x128x128xf32>
    %13 = vector.shape_cast %12 : vector<1x128x128xf32> to vector<128x128xf32>
    %cst_13 = arith.constant dense<0.000000e+00> : vector<128x128xf32>
    %14 = tpu.matmul %11, %13, %cst_13 {dimension_numbers = #tpu.dot_dimension_numbers<[1], [0], [0], [1], [0, 0, 1, 1], [], []>} : vector<128x128xf32>, vector<128x128xf32>, vector<128x128xf32> -> vector<128x128xf32>
    %cst_14 = arith.constant dense<0.000000e+00> : vector<128x128xf32>
    %15 = tpu.matmul %0, %14, %cst_14 {dimension_numbers = #tpu.dot_dimension_numbers<[1], [0], [0], [1], [0, 0, 1, 1], [], []>} : vector<128x128xf32>, vector<128x128xf32>, vector<128x128xf32> -> vector<128x128xf32>
    %c1_15 = arith.constant 1 : index
    %c0_16 = arith.constant 0 : index
    %c0_17 = arith.constant 0 : index
    %16 = vector.load %arg3[%c1_15, %c0_16, %c0_17] : memref<6x1x128xf32, #tpu.memory_space<vmem>>, vector<1x1x128xf32>
    %17 = vector.shape_cast %16 : vector<1x1x128xf32> to vector<1x128xf32>
    %18 = vector.broadcast %17 : vector<1x128xf32> to vector<128x128xf32>
    %19 = arith.addf %15, %18 : vector<128x128xf32>
    %cst_18 = arith.constant 0.000000e+00 : f32
    %20 = vector.broadcast %cst_18 : f32 to vector<128x128xf32>
    %21 = arith.maximumf %19, %20 : vector<128x128xf32>
    %c2 = arith.constant 2 : index
    %c0_19 = arith.constant 0 : index
    %c0_20 = arith.constant 0 : index
    %22 = vector.load %arg2[%c2, %c0_19, %c0_20] : memref<6x128x128xf32, #tpu.memory_space<vmem>>, vector<1x128x128xf32>
    %23 = vector.shape_cast %22 : vector<1x128x128xf32> to vector<128x128xf32>
    %cst_21 = arith.constant dense<0.000000e+00> : vector<128x128xf32>
    %24 = tpu.matmul %21, %23, %cst_21 {dimension_numbers = #tpu.dot_dimension_numbers<[1], [0], [0], [1], [0, 0, 1, 1], [], []>} : vector<128x128xf32>, vector<128x128xf32>, vector<128x128xf32> -> vector<128x128xf32>
    %cst_22 = arith.constant dense<0.000000e+00> : vector<128x128xf32>
    %25 = tpu.matmul %0, %24, %cst_22 {dimension_numbers = #tpu.dot_dimension_numbers<[1], [0], [0], [1], [0, 0, 1, 1], [], []>} : vector<128x128xf32>, vector<128x128xf32>, vector<128x128xf32> -> vector<128x128xf32>
    %c2_23 = arith.constant 2 : index
    %c0_24 = arith.constant 0 : index
    %c0_25 = arith.constant 0 : index
    %26 = vector.load %arg3[%c2_23, %c0_24, %c0_25] : memref<6x1x128xf32, #tpu.memory_space<vmem>>, vector<1x1x128xf32>
    %27 = vector.shape_cast %26 : vector<1x1x128xf32> to vector<1x128xf32>
    %28 = vector.broadcast %27 : vector<1x128xf32> to vector<128x128xf32>
    %29 = arith.addf %25, %28 : vector<128x128xf32>
    %c3 = arith.constant 3 : index
    %c0_26 = arith.constant 0 : index
    %c0_27 = arith.constant 0 : index
    %30 = vector.load %arg2[%c3, %c0_26, %c0_27] : memref<6x128x128xf32, #tpu.memory_space<vmem>>, vector<1x128x128xf32>
    %31 = vector.shape_cast %30 : vector<1x128x128xf32> to vector<128x128xf32>
    %cst_28 = arith.constant dense<0.000000e+00> : vector<128x128xf32>
    %32 = tpu.matmul %29, %31, %cst_28 {dimension_numbers = #tpu.dot_dimension_numbers<[1], [0], [0], [1], [0, 0, 1, 1], [], []>} : vector<128x128xf32>, vector<128x128xf32>, vector<128x128xf32> -> vector<128x128xf32>
    %cst_29 = arith.constant dense<0.000000e+00> : vector<128x128xf32>
    %33 = tpu.matmul %0, %32, %cst_29 {dimension_numbers = #tpu.dot_dimension_numbers<[1], [0], [0], [1], [0, 0, 1, 1], [], []>} : vector<128x128xf32>, vector<128x128xf32>, vector<128x128xf32> -> vector<128x128xf32>
    %c3_30 = arith.constant 3 : index
    %c0_31 = arith.constant 0 : index
    %c0_32 = arith.constant 0 : index
    %34 = vector.load %arg3[%c3_30, %c0_31, %c0_32] : memref<6x1x128xf32, #tpu.memory_space<vmem>>, vector<1x1x128xf32>
    %35 = vector.shape_cast %34 : vector<1x1x128xf32> to vector<1x128xf32>
    %36 = vector.broadcast %35 : vector<1x128xf32> to vector<128x128xf32>
    %37 = arith.addf %33, %36 : vector<128x128xf32>
    %cst_33 = arith.constant 0.000000e+00 : f32
    %38 = vector.broadcast %cst_33 : f32 to vector<128x128xf32>
    %39 = arith.maximumf %37, %38 : vector<128x128xf32>
    %c4 = arith.constant 4 : index
    %c0_34 = arith.constant 0 : index
    %c0_35 = arith.constant 0 : index
    %40 = vector.load %arg2[%c4, %c0_34, %c0_35] : memref<6x128x128xf32, #tpu.memory_space<vmem>>, vector<1x128x128xf32>
    %41 = vector.shape_cast %40 : vector<1x128x128xf32> to vector<128x128xf32>
    %cst_36 = arith.constant dense<0.000000e+00> : vector<128x128xf32>
    %42 = tpu.matmul %39, %41, %cst_36 {dimension_numbers = #tpu.dot_dimension_numbers<[1], [0], [0], [1], [0, 0, 1, 1], [], []>} : vector<128x128xf32>, vector<128x128xf32>, vector<128x128xf32> -> vector<128x128xf32>
    %cst_37 = arith.constant dense<0.000000e+00> : vector<128x128xf32>
    %43 = tpu.matmul %0, %42, %cst_37 {dimension_numbers = #tpu.dot_dimension_numbers<[1], [0], [0], [1], [0, 0, 1, 1], [], []>} : vector<128x128xf32>, vector<128x128xf32>, vector<128x128xf32> -> vector<128x128xf32>
    %c4_38 = arith.constant 4 : index
    %c0_39 = arith.constant 0 : index
    %c0_40 = arith.constant 0 : index
    %44 = vector.load %arg3[%c4_38, %c0_39, %c0_40] : memref<6x1x128xf32, #tpu.memory_space<vmem>>, vector<1x1x128xf32>
    %45 = vector.shape_cast %44 : vector<1x1x128xf32> to vector<1x128xf32>
    %46 = vector.broadcast %45 : vector<1x128xf32> to vector<128x128xf32>
    %47 = arith.addf %43, %46 : vector<128x128xf32>
    %cst_41 = arith.constant 0.000000e+00 : f32
    %48 = vector.broadcast %cst_41 : f32 to vector<128x128xf32>
    %49 = arith.maximumf %47, %48 : vector<128x128xf32>
    %c5 = arith.constant 5 : index
    %c0_42 = arith.constant 0 : index
    %c0_43 = arith.constant 0 : index
    %50 = vector.load %arg2[%c5, %c0_42, %c0_43] : memref<6x128x128xf32, #tpu.memory_space<vmem>>, vector<1x128x128xf32>
    %51 = vector.shape_cast %50 : vector<1x128x128xf32> to vector<128x128xf32>
    %cst_44 = arith.constant dense<0.000000e+00> : vector<128x128xf32>
    %52 = tpu.matmul %49, %51, %cst_44 {dimension_numbers = #tpu.dot_dimension_numbers<[1], [0], [0], [1], [0, 0, 1, 1], [], []>} : vector<128x128xf32>, vector<128x128xf32>, vector<128x128xf32> -> vector<128x128xf32>
    %cst_45 = arith.constant dense<0.000000e+00> : vector<128x128xf32>
    %53 = tpu.matmul %0, %52, %cst_45 {dimension_numbers = #tpu.dot_dimension_numbers<[1], [0], [0], [1], [0, 0, 1, 1], [], []>} : vector<128x128xf32>, vector<128x128xf32>, vector<128x128xf32> -> vector<128x128xf32>
    %c5_46 = arith.constant 5 : index
    %c0_47 = arith.constant 0 : index
    %c0_48 = arith.constant 0 : index
    %54 = vector.load %arg3[%c5_46, %c0_47, %c0_48] : memref<6x1x128xf32, #tpu.memory_space<vmem>>, vector<1x1x128xf32>
    %55 = vector.shape_cast %54 : vector<1x1x128xf32> to vector<1x128xf32>
    %56 = vector.broadcast %55 : vector<1x128xf32> to vector<128x128xf32>
    %57 = arith.addf %53, %56 : vector<128x128xf32>
    %c0_49 = arith.constant 0 : index
    %c0_50 = arith.constant 0 : index
    %58 = vector.load %arg4[%c0_49, %c0_50] : memref<128x128xf32, #tpu.memory_space<vmem>>, vector<128x128xf32>
    tpu.vector_store %arg4[%c0_49, %c0_50], %57 {strides = array<i32>} : memref<128x128xf32, #tpu.memory_space<vmem>>, vector<128x128xf32>,
    return
  }
}

</mosaic_0001>

<llo_original>
// kernel: forward.1
$region0: #{forward.1}
  #allocation0 [shape = 'u32[]', space=smem, size = 0x4, offset = 0x4, fixed_abs, tag = 'smem constant byte address 0x4 - core index']
  #allocation1 [shape = 'u32[72,128]{1,0:T(1,128)}', space=vmem, size = 0x9000, scoped, tag = 'internal scratch']
  %s0 = inlined_call_operand.vmem [shape: f32[128,128], index: 0, kind: input, shape index: {}]
  %s1 = inlined_call_operand.vmem [shape: f32[128,128], index: 1, kind: input, shape index: {}]
  %s2 = inlined_call_operand.hbm [shape: f32[6,128,128], index: 2, kind: input, shape index: {}]
  %s3 = inlined_call_operand.vmem [shape: f32[6,1,128], index: 3, kind: input, shape index: {}]
  %s4 = inlined_call_operand.vmem [shape: f32[128,128], index: 4, kind: output, shape index: {}]
  %s5 = sld [smem:[#allocation0]]
  $region30: #{forward.1} parent=0
    _
  %s7 = ssub.s32 1, %s5
  %s8 = scalar_select 0, %s7, %s5
  $region1: #{forward.1} parent=0
    #allocation2 [shape = 'u8[393216]{0}', space=vmem, size = 0x60000, scoped, tag = 'input window, operand 2, single buffered']
    #allocation3 [shape = 's32[1]{0}', space=sflag, size = 0x4, scoped, tag = 'scoped memory for forward.1']
    %9 = vsyncpa [#allocation3], 0
    // Predicated region
    $region2: #{forward.1} parent=1 // pred_check
      _
    $region3: #{forward.1} parent=1 // pred_check_branch
      %11 = sbr.rel (0) target = $region5
    $region4: #{forward.1} parent=1 // pred_region
      _
    $region5: #{forward.1} parent=1 // pred_fallthru
      _
    // Predicated region
    $region6: #{forward.1} parent=1 // pred_check
      _
    $region7: #{forward.1} parent=1 // pred_check_branch
      %13 = sbr.rel (0) target = $region9
    $region8: #{forward.1} parent=1 // pred_region
      _
    $region9: #{forward.1} parent=1 // pred_fallthru
      _
    // Predicated region
    $region10: #{forward.1} parent=1 // pred_check
      _
    $region11: #{forward.1} parent=1 // pred_check_branch
      %15 = sbr.rel (0) target = $region13
    $region12: #{forward.1} parent=1 // pred_region
      %17 = vsyncadd [#allocation3], 0
      %s18 = sshll.u32 %s2, 4
      %s19 = int_to_ptr.hbm [resolvable:$true] %s18
      %s20 = sshll.u32 [#allocation2], 4
      %s21 = int_to_ptr.vmem [resolvable:$true] %s20
      %26 = dma.hbm_to_vmem [thread:$0]  %s19, 12288, %s21, [#allocation3], 128, 128, 8
    $region13: #{forward.1} parent=1 // pred_fallthru
      _
    // Predicated region
    $region14: #{forward.1} parent=1 // pred_check
      _
    $region15: #{forward.1} parent=1 // pred_check_branch
      %28 = sbr.rel (0) target = $region17
    $region16: #{forward.1} parent=1 // pred_region
      _
    $region17: #{forward.1} parent=1 // pred_fallthru
      _
    // Predicated region
    $region18: #{forward.1} parent=1 // pred_check
      _
    $region19: #{forward.1} parent=1 // pred_check_branch
      %30 = sbr.rel (0) target = $region21
    $region20: #{forward.1} parent=1 // pred_region
      %32 = dma.done [#allocation3], 12288
    $region21: #{forward.1} parent=1 // pred_fallthru
      _
    %v33 = vld [vmem:[%s0] sm:$0xff]
    %v34 = vld [vmem:[%s0 + $0x8] sm:$0xff]
    %v35 = vld [vmem:[%s0 + $0x10] sm:$0xff]
    %v36 = vld [vmem:[%s0 + $0x18] sm:$0xff]
    %v37 = vld [vmem:[%s0 + $0x20] sm:$0xff]
    %v38 = vld [vmem:[%s0 + $0x28] sm:$0xff]
    %v39 = vld [vmem:[%s0 + $0x30] sm:$0xff]
    %v40 = vld [vmem:[%s0 + $0x38] sm:$0xff]
    %v41 = vld [vmem:[%s0 + $0x40] sm:$0xff]
    %v42 = vld [vmem:[%s0 + $0x48] sm:$0xff]
    %v43 = vld [vmem:[%s0 + $0x50] sm:$0xff]
    %v44 = vld [vmem:[%s0 + $0x58] sm:$0xff]
    %v45 = vld [vmem:[%s0 + $0x60] sm:$0xff]
    %v46 = vld [vmem:[%s0 + $0x68] sm:$0xff]
    %v47 = vld [vmem:[%s0 + $0x70] sm:$0xff]
    %v48 = vld [vmem:[%s0 + $0x78] sm:$0xff]
    %v49 = vld [vmem:[%s1] sm:$0xff]
    %v50 = vld [vmem:[%s1 + $0x8] sm:$0xff]
    %v51 = vld [vmem:[%s1 + $0x10] sm:$0xff]
    %v52 = vld [vmem:[%s1 + $0x18] sm:$0xff]
    %v53 = vld [vmem:[%s1 + $0x20] sm:$0xff]
    %v54 = vld [vmem:[%s1 + $0x28] sm:$0xff]
    %v55 = vld [vmem:[%s1 + $0x30] sm:$0xff]
    %v56 = vld [vmem:[%s1 + $0x38] sm:$0xff]
    %v57 = vld [vmem:[%s1 + $0x40] sm:$0xff]
    %v58 = vld [vmem:[%s1 + $0x48] sm:$0xff]
    %v59 = vld [vmem:[%s1 + $0x50] sm:$0xff]
    %v60 = vld [vmem:[%s1 + $0x58] sm:$0xff]
    %v61 = vld [vmem:[%s1 + $0x60] sm:$0xff]
    %v62 = vld [vmem:[%s1 + $0x68] sm:$0xff]
    %v63 = vld [vmem:[%s1 + $0x70] sm:$0xff]
    %v64 = vld [vmem:[%s1 + $0x78] sm:$0xff]
    %v65 = vld [vmem:[#allocation2] sm:$0xff]
    %v66 = vld [vmem:[#allocation2 + $0x8] sm:$0xff]
    %v67 = vld [vmem:[#allocation2 + $0x10] sm:$0xff]
    %v68 = vld [vmem:[#allocation2 + $0x18] sm:$0xff]
    %v69 = vld [vmem:[#allocation2 + $0x20] sm:$0xff]
    %v70 = vld [vmem:[#allocation2 + $0x28] sm:$0xff]
    %v71 = vld [vmem:[#allocation2 + $0x30] sm:$0xff]
    %v72 = vld [vmem:[#allocation2 + $0x38] sm:$0xff]
    %v73 = vld [vmem:[#allocation2 + $0x40] sm:$0xff]
    %v74 = vld [vmem:[#allocation2 + $0x48] sm:$0xff]
    %v75 = vld [vmem:[#allocation2 + $0x50] sm:$0xff]
    %v76 = vld [vmem:[#allocation2 + $0x58] sm:$0xff]
    %v77 = vld [vmem:[#allocation2 + $0x60] sm:$0xff]
    %v78 = vld [vmem:[#allocation2 + $0x68] sm:$0xff]
    %v79 = vld [vmem:[#allocation2 + $0x70] sm:$0xff]
    %v80 = vld [vmem:[#allocation2 + $0x78] sm:$0xff]
    %81 = vmatpush.msra.mxu0 %v80
    %82 = vmatpush.msra.mxu0 %v79
    %83 = vmatpush.msra.mxu0 %v78
    %84 = vmatpush.msra.mxu0 %v77
    %85 = vmatpush.msra.mxu0 %v76
    %86 = vmatpush.msra.mxu0 %v75
    %87 = vmatpush.msra.mxu0 %v74
    %88 = vmatpush.msra.mxu0 %v73
    %89 = vmatpush.msra.mxu0 %v72
    %90 = vmatpush.msra.mxu0 %v71
    %91 = vmatpush.msra.mxu0 %v70
    %92 = vmatpush.msra.mxu0 %v69
    %93 = vmatpush.msra.mxu0 %v68
    %94 = vmatpush.msra.mxu0 %v67
    %95 = vmatpush.msra.mxu0 %v66
    %96 = vmatpush.msra.mxu0 %v65
    %97 = vmatmul.f32.gmra.mxu0 %v49
    %v98 = vpop.f32.mrf.mxu0
    %v99 = vadd.f32 0.0, %v98
    %100 = vmatmul.f32.gmra.mxu0 %v50
    %v101 = vpop.f32.mrf.mxu0
    %v102 = vadd.f32 0.0, %v101
    %103 = vmatmul.f32.gmra.mxu0 %v51
    %v104 = vpop.f32.mrf.mxu0
    %v105 = vadd.f32 0.0, %v104
    %106 = vmatmul.f32.gmra.mxu0 %v52
    %v107 = vpop.f32.mrf.mxu0
    %v108 = vadd.f32 0.0, %v107
    %109 = vmatmul.f32.gmra.mxu0 %v53
    %v110 = vpop.f32.mrf.mxu0
    %v111 = vadd.f32 0.0, %v110
    %112 = vmatmul.f32.gmra.mxu0 %v54
    %v113 = vpop.f32.mrf.mxu0
    %v114 = vadd.f32 0.0, %v113
    %115 = vmatmul.f32.gmra.mxu0 %v55
    %v116 = vpop.f32.mrf.mxu0
    %v117 = vadd.f32 0.0, %v116
    %118 = vmatmul.f32.gmra.mxu0 %v56
    %v119 = vpop.f32.mrf.mxu0
    %v120 = vadd.f32 0.0, %v119
    %121 = vmatmul.f32.gmra.mxu0 %v57
    %v122 = vpop.f32.mrf.mxu0
    %v123 = vadd.f32 0.0, %v122
    %124 = vmatmul.f32.gmra.mxu0 %v58
    %v125 = vpop.f32.mrf.mxu0
    %v126 = vadd.f32 0.0, %v125
    %127 = vmatmul.f32.gmra.mxu0 %v59
    %v128 = vpop.f32.mrf.mxu0
    %v129 = vadd.f32 0.0, %v128
    %130 = vmatmul.f32.gmra.mxu0 %v60
    %v131 = vpop.f32.mrf.mxu0
    %v132 = vadd.f32 0.0, %v131
    %133 = vmatmul.f32.gmra.mxu0 %v61
    %v134 = vpop.f32.mrf.mxu0
    %v135 = vadd.f32 0.0, %v134
    %136 = vmatmul.f32.gmra.mxu0 %v62
    %v137 = vpop.f32.mrf.mxu0
    %v138 = vadd.f32 0.0, %v137
    %139 = vmatmul.f32.gmra.mxu0 %v63
    %v140 = vpop.f32.mrf.mxu0
    %v141 = vadd.f32 0.0, %v140
    %142 = vmatmul.f32.gmra.mxu0 %v64
    %v143 = vpop.f32.mrf.mxu0
    %v144 = vadd.f32 0.0, %v143
    %145 = vdwg.mxu0
    %v146 = vld [vmem:[%s3] sm:$0x1]
    %v148 = vperm.slane %v146, 0
    %150 = vmatpush.msra.mxu0 %v144
    %151 = vmatpush.msra.mxu0 %v141
    %152 = vmatpush.msra.mxu0 %v138
    %153 = vmatpush.msra.mxu0 %v135
    %154 = vmatpush.msra.mxu0 %v132
    %155 = vmatpush.msra.mxu0 %v129
    %156 = vmatpush.msra.mxu0 %v126
    %157 = vmatpush.msra.mxu0 %v123
    %158 = vmatpush.msra.mxu0 %v120
    %159 = vmatpush.msra.mxu0 %v117
    %160 = vmatpush.msra.mxu0 %v114
    %161 = vmatpush.msra.mxu0 %v111
    %162 = vmatpush.msra.mxu0 %v108
    %163 = vmatpush.msra.mxu0 %v105
    %164 = vmatpush.msra.mxu0 %v102
    %165 = vmatpush.msra.mxu0 %v99
    %166 = vmatmul.f32.gmra.mxu0 %v33
    %v167 = vpop.f32.mrf.mxu0
    %v168 = vadd.f32 %v148, %v167
    %169 = vmatmul.f32.gmra.mxu0 %v34
    %v170 = vpop.f32.mrf.mxu0
    %v171 = vadd.f32 %v148, %v170
    %172 = vmatmul.f32.gmra.mxu0 %v35
    %v173 = vpop.f32.mrf.mxu0
    %v174 = vadd.f32 %v148, %v173
    %175 = vmatmul.f32.gmra.mxu0 %v36
    %v176 = vpop.f32.mrf.mxu0
    %v177 = vadd.f32 %v148, %v176
    %178 = vmatmul.f32.gmra.mxu0 %v37
    %v179 = vpop.f32.mrf.mxu0
    %v180 = vadd.f32 %v148, %v179
    %181 = vmatmul.f32.gmra.mxu0 %v38
    %v182 = vpop.f32.mrf.mxu0
    %v183 = vadd.f32 %v148, %v182
    %184 = vmatmul.f32.gmra.mxu0 %v39
    %v185 = vpop.f32.mrf.mxu0
    %v186 = vadd.f32 %v148, %v185
    %187 = vmatmul.f32.gmra.mxu0 %v40
    %v188 = vpop.f32.mrf.mxu0
    %v189 = vadd.f32 %v148, %v188
    %190 = vmatmul.f32.gmra.mxu0 %v41
    %v191 = vpop.f32.mrf.mxu0
    %v192 = vadd.f32 %v148, %v191
    %193 = vmatmul.f32.gmra.mxu0 %v42
    %v194 = vpop.f32.mrf.mxu0
    %v195 = vadd.f32 %v148, %v194
    %196 = vmatmul.f32.gmra.mxu0 %v43
    %v197 = vpop.f32.mrf.mxu0
    %v198 = vadd.f32 %v148, %v197
    %199 = vmatmul.f32.gmra.mxu0 %v44
    %v200 = vpop.f32.mrf.mxu0
    %v201 = vadd.f32 %v148, %v200
    %202 = vmatmul.f32.gmra.mxu0 %v45
    %v203 = vpop.f32.mrf.mxu0
    %v204 = vadd.f32 %v148, %v203
    %205 = vmatmul.f32.gmra.mxu0 %v46
    %v206 = vpop.f32.mrf.mxu0
    %v207 = vadd.f32 %v148, %v206
    %208 = vmatmul.f32.gmra.mxu0 %v47
    %v209 = vpop.f32.mrf.mxu0
    %v210 = vadd.f32 %v148, %v209
    %211 = vmatmul.f32.gmra.mxu0 %v48
    %v212 = vpop.f32.mrf.mxu0
    %v213 = vadd.f32 %v148, %v212
    %214 = vdwg.mxu0
    %v215 = vmax.f32 %v168, 0.0
    %v216 = vmax.f32 %v171, 0.0
    %v217 = vmax.f32 %v174, 0.0
    %v218 = vmax.f32 %v177, 0.0
    %v219 = vmax.f32 %v180, 0.0
    %v220 = vmax.f32 %v183, 0.0
    %v221 = vmax.f32 %v186, 0.0
    %v222 = vmax.f32 %v189, 0.0
    %v223 = vmax.f32 %v192, 0.0
    %v224 = vmax.f32 %v195, 0.0
    %v225 = vmax.f32 %v198, 0.0
    %v226 = vmax.f32 %v201, 0.0
    %v227 = vmax.f32 %v204, 0.0
    %v228 = vmax.f32 %v207, 0.0
    %v229 = vmax.f32 %v210, 0.0
    %v230 = vmax.f32 %v213, 0.0
    %s231 = scalar_lea.vmem [#allocation2], 128
    %v232 = vld [vmem:[%s231] sm:$0xff]
    %v233 = vld [vmem:[%s231 + $0x8] sm:$0xff]
    %v234 = vld [vmem:[%s231 + $0x10] sm:$0xff]
    %v235 = vld [vmem:[%s231 + $0x18] sm:$0xff]
    %v236 = vld [vmem:[%s231 + $0x20] sm:$0xff]
    %v237 = vld [vmem:[%s231 + $0x28] sm:$0xff]
    %v238 = vld [vmem:[%s231 + $0x30] sm:$0xff]
    %v239 = vld [vmem:[%s231 + $0x38] sm:$0xff]
    %v240 = vld [vmem:[%s231 + $0x40] sm:$0xff]
    %v241 = vld [vmem:[%s231 + $0x48] sm:$0xff]
    %v242 = vld [vmem:[%s231 + $0x50] sm:$0xff]
    %v243 = vld [vmem:[%s231 + $0x58] sm:$0xff]
    %v244 = vld [vmem:[%s231 + $0x60] sm:$0xff]
    %v245 = vld [vmem:[%s231 + $0x68] sm:$0xff]
    %v246 = vld [vmem:[%s231 + $0x70] sm:$0xff]
    %v247 = vld [vmem:[%s231 + $0x78] sm:$0xff]
    %248 = vmatpush.msra.mxu0 %v247
    %249 = vmatpush.msra.mxu0 %v246
    %250 = vmatpush.msra.mxu0 %v245
    %251 = vmatpush.msra.mxu0 %v244
    %252 = vmatpush.msra.mxu0 %v243
    %253 = vmatpush.msra.mxu0 %v242
    %254 = vmatpush.msra.mxu0 %v241
    %255 = vmatpush.msra.mxu0 %v240
    %256 = vmatpush.msra.mxu0 %v239
    %257 = vmatpush.msra.mxu0 %v238
    %258 = vmatpush.msra.mxu0 %v237
    %259 = vmatpush.msra.mxu0 %v236
    %260 = vmatpush.msra.mxu0 %v235
    %261 = vmatpush.msra.mxu0 %v234
    %262 = vmatpush.msra.mxu0 %v233
    %263 = vmatpush.msra.mxu0 %v232
    %264 = vmatmul.f32.gmra.mxu0 %v215
    %v265 = vpop.f32.mrf.mxu0
    %v266 = vadd.f32 0.0, %v265
    %267 = vmatmul.f32.gmra.mxu0 %v216
    %v268 = vpop.f32.mrf.mxu0
    %v269 = vadd.f32 0.0, %v268
    %270 = vmatmul.f32.gmra.mxu0 %v217
    %v271 = vpop.f32.mrf.mxu0
    %v272 = vadd.f32 0.0, %v271
    %273 = vmatmul.f32.gmra.mxu0 %v218
    %v274 = vpop.f32.mrf.mxu0
    %v275 = vadd.f32 0.0, %v274
    %276 = vmatmul.f32.gmra.mxu0 %v219
    %v277 = vpop.f32.mrf.mxu0
    %v278 = vadd.f32 0.0, %v277
    %279 = vmatmul.f32.gmra.mxu0 %v220
    %v280 = vpop.f32.mrf.mxu0
    %v281 = vadd.f32 0.0, %v280
    %282 = vmatmul.f32.gmra.mxu0 %v221
    %v283 = vpop.f32.mrf.mxu0
    %v284 = vadd.f32 0.0, %v283
    %285 = vmatmul.f32.gmra.mxu0 %v222
    %v286 = vpop.f32.mrf.mxu0
    %v287 = vadd.f32 0.0, %v286
    %288 = vmatmul.f32.gmra.mxu0 %v223
    %v289 = vpop.f32.mrf.mxu0
    %v290 = vadd.f32 0.0, %v289
    %291 = vmatmul.f32.gmra.mxu0 %v224
    %v292 = vpop.f32.mrf.mxu0
    %v293 = vadd.f32 0.0, %v292
    %294 = vmatmul.f32.gmra.mxu0 %v225
    %v295 = vpop.f32.mrf.mxu0
    %v296 = vadd.f32 0.0, %v295
    %297 = vmatmul.f32.gmra.mxu0 %v226
    %v298 = vpop.f32.mrf.mxu0
    %v299 = vadd.f32 0.0, %v298
    %300 = vmatmul.f32.gmra.mxu0 %v227
    %v301 = vpop.f32.mrf.mxu0
    %v302 = vadd.f32 0.0, %v301
    %303 = vmatmul.f32.gmra.mxu0 %v228
    %v304 = vpop.f32.mrf.mxu0
    %v305 = vadd.f32 0.0, %v304
    %306 = vmatmul.f32.gmra.mxu0 %v229
    %v307 = vpop.f32.mrf.mxu0
    %v308 = vadd.f32 0.0, %v307
    %309 = vmatmul.f32.gmra.mxu0 %v230
    %v310 = vpop.f32.mrf.mxu0
    %v311 = vadd.f32 0.0, %v310
    %312 = vdwg.mxu0
    %s313 = scalar_lea.vmem %s3, 1
    %v314 = vld [vmem:[%s313] sm:$0x1]
    %v316 = vperm.slane %v314, 0
    %318 = vmatpush.msra.mxu0 %v311
    %319 = vmatpush.msra.mxu0 %v308
    %320 = vmatpush.msra.mxu0 %v305
    %321 = vmatpush.msra.mxu0 %v302
    %322 = vmatpush.msra.mxu0 %v299
    %323 = vmatpush.msra.mxu0 %v296
    %324 = vmatpush.msra.mxu0 %v293
    %325 = vmatpush.msra.mxu0 %v290
    %326 = vmatpush.msra.mxu0 %v287
    %327 = vmatpush.msra.mxu0 %v284
    %328 = vmatpush.msra.mxu0 %v281
    %329 = vmatpush.msra.mxu0 %v278
    %330 = vmatpush.msra.mxu0 %v275
    %331 = vmatpush.msra.mxu0 %v272
    %332 = vmatpush.msra.mxu0 %v269
    %333 = vmatpush.msra.mxu0 %v266
    %334 = vmatmul.f32.gmra.mxu0 %v33
    %v335 = vpop.f32.mrf.mxu0
    %v336 = vadd.f32 %v316, %v335
    %337 = vmatmul.f32.gmra.mxu0 %v34
    %v338 = vpop.f32.mrf.mxu0
    %v339 = vadd.f32 %v316, %v338
    %340 = vmatmul.f32.gmra.mxu0 %v35
    %v341 = vpop.f32.mrf.mxu0
    %v342 = vadd.f32 %v316, %v341
    %343 = vmatmul.f32.gmra.mxu0 %v36
    %v344 = vpop.f32.mrf.mxu0
    %v345 = vadd.f32 %v316, %v344
    %346 = vmatmul.f32.gmra.mxu0 %v37
    %v347 = vpop.f32.mrf.mxu0
    %v348 = vadd.f32 %v316, %v347
    %349 = vmatmul.f32.gmra.mxu0 %v38
    %v350 = vpop.f32.mrf.mxu0
    %v351 = vadd.f32 %v316, %v350
    %352 = vmatmul.f32.gmra.mxu0 %v39
    %v353 = vpop.f32.mrf.mxu0
    %v354 = vadd.f32 %v316, %v353
    %355 = vmatmul.f32.gmra.mxu0 %v40
    %v356 = vpop.f32.mrf.mxu0
    %v357 = vadd.f32 %v316, %v356
    %358 = vmatmul.f32.gmra.mxu0 %v41
    %v359 = vpop.f32.mrf.mxu0
    %v360 = vadd.f32 %v316, %v359
    %361 = vmatmul.f32.gmra.mxu0 %v42
    %v362 = vpop.f32.mrf.mxu0
    %v363 = vadd.f32 %v316, %v362
    %364 = vmatmul.f32.gmra.mxu0 %v43
    %v365 = vpop.f32.mrf.mxu0
    %v366 = vadd.f32 %v316, %v365
    %367 = vmatmul.f32.gmra.mxu0 %v44
    %v368 = vpop.f32.mrf.mxu0
    %v369 = vadd.f32 %v316, %v368
    %370 = vmatmul.f32.gmra.mxu0 %v45
    %v371 = vpop.f32.mrf.mxu0
    %v372 = vadd.f32 %v316, %v371
    %373 = vmatmul.f32.gmra.mxu0 %v46
    %v374 = vpop.f32.mrf.mxu0
    %v375 = vadd.f32 %v316, %v374
    %376 = vmatmul.f32.gmra.mxu0 %v47
    %v377 = vpop.f32.mrf.mxu0
    %v378 = vadd.f32 %v316, %v377
    %379 = vmatmul.f32.gmra.mxu0 %v48
    %v380 = vpop.f32.mrf.mxu0
    %v381 = vadd.f32 %v316, %v380
    %382 = vdwg.mxu0
    %v383 = vmax.f32 %v336, 0.0
    %v384 = vmax.f32 %v339, 0.0
    %v385 = vmax.f32 %v342, 0.0
    %v386 = vmax.f32 %v345, 0.0
    %v387 = vmax.f32 %v348, 0.0
    %v388 = vmax.f32 %v351, 0.0
    %v389 = vmax.f32 %v354, 0.0
    %v390 = vmax.f32 %v357, 0.0
    %v391 = vmax.f32 %v360, 0.0
    %v392 = vmax.f32 %v363, 0.0
    %v393 = vmax.f32 %v366, 0.0
    %v394 = vmax.f32 %v369, 0.0
    %v395 = vmax.f32 %v372, 0.0
    %v396 = vmax.f32 %v375, 0.0
    %v397 = vmax.f32 %v378, 0.0
    %v398 = vmax.f32 %v381, 0.0
    %s399 = scalar_lea.vmem [#allocation2], 256
    %v400 = vld [vmem:[%s399] sm:$0xff]
    %v401 = vld [vmem:[%s399 + $0x8] sm:$0xff]
    %v402 = vld [vmem:[%s399 + $0x10] sm:$0xff]
    %v403 = vld [vmem:[%s399 + $0x18] sm:$0xff]
    %v404 = vld [vmem:[%s399 + $0x20] sm:$0xff]
    %v405 = vld [vmem:[%s399 + $0x28] sm:$0xff]
    %v406 = vld [vmem:[%s399 + $0x30] sm:$0xff]
    %v407 = vld [vmem:[%s399 + $0x38] sm:$0xff]
    %v408 = vld [vmem:[%s399 + $0x40] sm:$0xff]
    %v409 = vld [vmem:[%s399 + $0x48] sm:$0xff]
    %v410 = vld [vmem:[%s399 + $0x50] sm:$0xff]
    %v411 = vld [vmem:[%s399 + $0x58] sm:$0xff]
    %v412 = vld [vmem:[%s399 + $0x60] sm:$0xff]
    %v413 = vld [vmem:[%s399 + $0x68] sm:$0xff]
    %v414 = vld [vmem:[%s399 + $0x70] sm:$0xff]
    %v415 = vld [vmem:[%s399 + $0x78] sm:$0xff]
    %416 = vmatpush.msra.mxu0 %v415
    %417 = vmatpush.msra.mxu0 %v414
    %418 = vmatpush.msra.mxu0 %v413
    %419 = vmatpush.msra.mxu0 %v412
    %420 = vmatpush.msra.mxu0 %v411
    %421 = vmatpush.msra.mxu0 %v410
    %422 = vmatpush.msra.mxu0 %v409
    %423 = vmatpush.msra.mxu0 %v408
    %424 = vmatpush.msra.mxu0 %v407
    %425 = vmatpush.msra.mxu0 %v406
    %426 = vmatpush.msra.mxu0 %v405
    %427 = vmatpush.msra.mxu0 %v404
    %428 = vmatpush.msra.mxu0 %v403
    %429 = vmatpush.msra.mxu0 %v402
    %430 = vmatpush.msra.mxu0 %v401
    %431 = vmatpush.msra.mxu0 %v400
    %432 = vmatmul.f32.gmra.mxu0 %v383
    %v433 = vpop.f32.mrf.mxu0
    %v434 = vadd.f32 0.0, %v433
    %435 = vmatmul.f32.gmra.mxu0 %v384
    %v436 = vpop.f32.mrf.mxu0
    %v437 = vadd.f32 0.0, %v436
    %438 = vmatmul.f32.gmra.mxu0 %v385
    %v439 = vpop.f32.mrf.mxu0
    %v440 = vadd.f32 0.0, %v439
    %441 = vmatmul.f32.gmra.mxu0 %v386
    %v442 = vpop.f32.mrf.mxu0
    %v443 = vadd.f32 0.0, %v442
    %444 = vmatmul.f32.gmra.mxu0 %v387
    %v445 = vpop.f32.mrf.mxu0
    %v446 = vadd.f32 0.0, %v445
    %447 = vmatmul.f32.gmra.mxu0 %v388
    %v448 = vpop.f32.mrf.mxu0
    %v449 = vadd.f32 0.0, %v448
    %450 = vmatmul.f32.gmra.mxu0 %v389
    %v451 = vpop.f32.mrf.mxu0
    %v452 = vadd.f32 0.0, %v451
    %453 = vmatmul.f32.gmra.mxu0 %v390
    %v454 = vpop.f32.mrf.mxu0
    %v455 = vadd.f32 0.0, %v454
    %456 = vmatmul.f32.gmra.mxu0 %v391
    %v457 = vpop.f32.mrf.mxu0
    %v458 = vadd.f32 0.0, %v457
    %459 = vmatmul.f32.gmra.mxu0 %v392
    %v460 = vpop.f32.mrf.mxu0
    %v461 = vadd.f32 0.0, %v460
    %462 = vmatmul.f32.gmra.mxu0 %v393
    %v463 = vpop.f32.mrf.mxu0
    %v464 = vadd.f32 0.0, %v463
    %465 = vmatmul.f32.gmra.mxu0 %v394
    %v466 = vpop.f32.mrf.mxu0
    %v467 = vadd.f32 0.0, %v466
    %468 = vmatmul.f32.gmra.mxu0 %v395
    %v469 = vpop.f32.mrf.mxu0
    %v470 = vadd.f32 0.0, %v469
    %471 = vmatmul.f32.gmra.mxu0 %v396
    %v472 = vpop.f32.mrf.mxu0
    %v473 = vadd.f32 0.0, %v472
    %474 = vmatmul.f32.gmra.mxu0 %v397
    %v475 = vpop.f32.mrf.mxu0
    %v476 = vadd.f32 0.0, %v475
    %477 = vmatmul.f32.gmra.mxu0 %v398
    %v478 = vpop.f32.mrf.mxu0
    %v479 = vadd.f32 0.0, %v478
    %480 = vdwg.mxu0
    %s481 = scalar_lea.vmem %s3, 2
    %v482 = vld [vmem:[%s481] sm:$0x1]
    %v484 = vperm.slane %v482, 0
    %486 = vmatpush.msra.mxu0 %v479
    %487 = vmatpush.msra.mxu0 %v476
    %488 = vmatpush.msra.mxu0 %v473
    %489 = vmatpush.msra.mxu0 %v470
    %490 = vmatpush.msra.mxu0 %v467
    %491 = vmatpush.msra.mxu0 %v464
    %492 = vmatpush.msra.mxu0 %v461
    %493 = vmatpush.msra.mxu0 %v458
    %494 = vmatpush.msra.mxu0 %v455
    %495 = vmatpush.msra.mxu0 %v452
    %496 = vmatpush.msra.mxu0 %v449
    %497 = vmatpush.msra.mxu0 %v446
    %498 = vmatpush.msra.mxu0 %v443
    %499 = vmatpush.msra.mxu0 %v440
    %500 = vmatpush.msra.mxu0 %v437
    %501 = vmatpush.msra.mxu0 %v434
    %502 = vmatmul.f32.gmra.mxu0 %v33
    %v503 = vpop.f32.mrf.mxu0
    %v504 = vadd.f32 %v484, %v503
    %505 = vmatmul.f32.gmra.mxu0 %v34
    %v506 = vpop.f32.mrf.mxu0
    %v507 = vadd.f32 %v484, %v506
    %508 = vmatmul.f32.gmra.mxu0 %v35
    %v509 = vpop.f32.mrf.mxu0
    %v510 = vadd.f32 %v484, %v509
    %511 = vmatmul.f32.gmra.mxu0 %v36
    %v512 = vpop.f32.mrf.mxu0
    %v513 = vadd.f32 %v484, %v512
    %514 = vmatmul.f32.gmra.mxu0 %v37
    %v515 = vpop.f32.mrf.mxu0
    %v516 = vadd.f32 %v484, %v515
    %517 = vmatmul.f32.gmra.mxu0 %v38
    %v518 = vpop.f32.mrf.mxu0
    %v519 = vadd.f32 %v484, %v518
    %520 = vmatmul.f32.gmra.mxu0 %v39
    %v521 = vpop.f32.mrf.mxu0
    %v522 = vadd.f32 %v484, %v521
    %523 = vmatmul.f32.gmra.mxu0 %v40
    %v524 = vpop.f32.mrf.mxu0
    %v525 = vadd.f32 %v484, %v524
    %526 = vmatmul.f32.gmra.mxu0 %v41
    %v527 = vpop.f32.mrf.mxu0
    %v528 = vadd.f32 %v484, %v527
    %529 = vmatmul.f32.gmra.mxu0 %v42
    %v530 = vpop.f32.mrf.mxu0
    %v531 = vadd.f32 %v484, %v530
    %532 = vmatmul.f32.gmra.mxu0 %v43
    %v533 = vpop.f32.mrf.mxu0
    %v534 = vadd.f32 %v484, %v533
    %535 = vmatmul.f32.gmra.mxu0 %v44
    %v536 = vpop.f32.mrf.mxu0
    %v537 = vadd.f32 %v484, %v536
    %538 = vmatmul.f32.gmra.mxu0 %v45
    %v539 = vpop.f32.mrf.mxu0
    %v540 = vadd.f32 %v484, %v539
    %541 = vmatmul.f32.gmra.mxu0 %v46
    %v542 = vpop.f32.mrf.mxu0
    %v543 = vadd.f32 %v484, %v542
    %544 = vmatmul.f32.gmra.mxu0 %v47
    %v545 = vpop.f32.mrf.mxu0
    %v546 = vadd.f32 %v484, %v545
    %547 = vmatmul.f32.gmra.mxu0 %v48
    %v548 = vpop.f32.mrf.mxu0
    %v549 = vadd.f32 %v484, %v548
    %550 = vdwg.mxu0
    %s551 = scalar_lea.vmem [#allocation2], 384
    %v552 = vld [vmem:[%s551] sm:$0xff]
    %v553 = vld [vmem:[%s551 + $0x8] sm:$0xff]
    %v554 = vld [vmem:[%s551 + $0x10] sm:$0xff]
    %v555 = vld [vmem:[%s551 + $0x18] sm:$0xff]
    %v556 = vld [vmem:[%s551 + $0x20] sm:$0xff]
    %v557 = vld [vmem:[%s551 + $0x28] sm:$0xff]
    %v558 = vld [vmem:[%s551 + $0x30] sm:$0xff]
    %v559 = vld [vmem:[%s551 + $0x38] sm:$0xff]
    %v560 = vld [vmem:[%s551 + $0x40] sm:$0xff]
    %v561 = vld [vmem:[%s551 + $0x48] sm:$0xff]
    %v562 = vld [vmem:[%s551 + $0x50] sm:$0xff]
    %v563 = vld [vmem:[%s551 + $0x58] sm:$0xff]
    %v564 = vld [vmem:[%s551 + $0x60] sm:$0xff]
    %v565 = vld [vmem:[%s551 + $0x68] sm:$0xff]
    %v566 = vld [vmem:[%s551 + $0x70] sm:$0xff]
    %v567 = vld [vmem:[%s551 + $0x78] sm:$0xff]
    %568 = vmatpush.msra.mxu0 %v567
    %569 = vmatpush.msra.mxu0 %v566
    %570 = vmatpush.msra.mxu0 %v565
    %571 = vmatpush.msra.mxu0 %v564
    %572 = vmatpush.msra.mxu0 %v563
    %573 = vmatpush.msra.mxu0 %v562
    %574 = vmatpush.msra.mxu0 %v561
    %575 = vmatpush.msra.mxu0 %v560
    %576 = vmatpush.msra.mxu0 %v559
    %577 = vmatpush.msra.mxu0 %v558
    %578 = vmatpush.msra.mxu0 %v557
    %579 = vmatpush.msra.mxu0 %v556
    %580 = vmatpush.msra.mxu0 %v555
    %581 = vmatpush.msra.mxu0 %v554
    %582 = vmatpush.msra.mxu0 %v553
    %583 = vmatpush.msra.mxu0 %v552
    %584 = vmatmul.f32.gmra.mxu0 %v504
    %v585 = vpop.f32.mrf.mxu0
    %v586 = vadd.f32 0.0, %v585
    %587 = vmatmul.f32.gmra.mxu0 %v507
    %v588 = vpop.f32.mrf.mxu0
    %v589 = vadd.f32 0.0, %v588
    %590 = vmatmul.f32.gmra.mxu0 %v510
    %v591 = vpop.f32.mrf.mxu0
    %v592 = vadd.f32 0.0, %v591
    %593 = vmatmul.f32.gmra.mxu0 %v513
    %v594 = vpop.f32.mrf.mxu0
    %v595 = vadd.f32 0.0, %v594
    %596 = vmatmul.f32.gmra.mxu0 %v516
    %v597 = vpop.f32.mrf.mxu0
    %v598 = vadd.f32 0.0, %v597
    %599 = vmatmul.f32.gmra.mxu0 %v519
    %v600 = vpop.f32.mrf.mxu0
    %v601 = vadd.f32 0.0, %v600
    %602 = vmatmul.f32.gmra.mxu0 %v522
    %v603 = vpop.f32.mrf.mxu0
    %v604 = vadd.f32 0.0, %v603
    %605 = vmatmul.f32.gmra.mxu0 %v525
    %v606 = vpop.f32.mrf.mxu0
    %v607 = vadd.f32 0.0, %v606
    %608 = vmatmul.f32.gmra.mxu0 %v528
    %v609 = vpop.f32.mrf.mxu0
    %v610 = vadd.f32 0.0, %v609
    %611 = vmatmul.f32.gmra.mxu0 %v531
    %v612 = vpop.f32.mrf.mxu0
    %v613 = vadd.f32 0.0, %v612
    %614 = vmatmul.f32.gmra.mxu0 %v534
    %v615 = vpop.f32.mrf.mxu0
    %v616 = vadd.f32 0.0, %v615
    %617 = vmatmul.f32.gmra.mxu0 %v537
    %v618 = vpop.f32.mrf.mxu0
    %v619 = vadd.f32 0.0, %v618
    %620 = vmatmul.f32.gmra.mxu0 %v540
    %v621 = vpop.f32.mrf.mxu0
    %v622 = vadd.f32 0.0, %v621
    %623 = vmatmul.f32.gmra.mxu0 %v543
    %v624 = vpop.f32.mrf.mxu0
    %v625 = vadd.f32 0.0, %v624
    %626 = vmatmul.f32.gmra.mxu0 %v546
    %v627 = vpop.f32.mrf.mxu0
    %v628 = vadd.f32 0.0, %v627
    %629 = vmatmul.f32.gmra.mxu0 %v549
    %v630 = vpop.f32.mrf.mxu0
    %v631 = vadd.f32 0.0, %v630
    %632 = vdwg.mxu0
    %s633 = scalar_lea.vmem %s3, 3
    %v634 = vld [vmem:[%s633] sm:$0x1]
    %v636 = vperm.slane %v634, 0
    %638 = vmatpush.msra.mxu0 %v631
    %639 = vmatpush.msra.mxu0 %v628
    %640 = vmatpush.msra.mxu0 %v625
    %641 = vmatpush.msra.mxu0 %v622
    %642 = vmatpush.msra.mxu0 %v619
    %643 = vmatpush.msra.mxu0 %v616
    %644 = vmatpush.msra.mxu0 %v613
    %645 = vmatpush.msra.mxu0 %v610
    %646 = vmatpush.msra.mxu0 %v607
    %647 = vmatpush.msra.mxu0 %v604
    %648 = vmatpush.msra.mxu0 %v601
    %649 = vmatpush.msra.mxu0 %v598
    %650 = vmatpush.msra.mxu0 %v595
    %651 = vmatpush.msra.mxu0 %v592
    %652 = vmatpush.msra.mxu0 %v589
    %653 = vmatpush.msra.mxu0 %v586
    %654 = vmatmul.f32.gmra.mxu0 %v33
    %v655 = vpop.f32.mrf.mxu0
    %v656 = vadd.f32 %v636, %v655
    %657 = vmatmul.f32.gmra.mxu0 %v34
    %v658 = vpop.f32.mrf.mxu0
    %v659 = vadd.f32 %v636, %v658
    %660 = vmatmul.f32.gmra.mxu0 %v35
    %v661 = vpop.f32.mrf.mxu0
    %v662 = vadd.f32 %v636, %v661
    %663 = vmatmul.f32.gmra.mxu0 %v36
    %v664 = vpop.f32.mrf.mxu0
    %v665 = vadd.f32 %v636, %v664
    %666 = vmatmul.f32.gmra.mxu0 %v37
    %v667 = vpop.f32.mrf.mxu0
    %v668 = vadd.f32 %v636, %v667
    %669 = vmatmul.f32.gmra.mxu0 %v38
    %v670 = vpop.f32.mrf.mxu0
    %v671 = vadd.f32 %v636, %v670
    %672 = vmatmul.f32.gmra.mxu0 %v39
    %v673 = vpop.f32.mrf.mxu0
    %v674 = vadd.f32 %v636, %v673
    %675 = vmatmul.f32.gmra.mxu0 %v40
    %v676 = vpop.f32.mrf.mxu0
    %v677 = vadd.f32 %v636, %v676
    %678 = vmatmul.f32.gmra.mxu0 %v41
    %v679 = vpop.f32.mrf.mxu0
    %v680 = vadd.f32 %v636, %v679
    %681 = vmatmul.f32.gmra.mxu0 %v42
    %v682 = vpop.f32.mrf.mxu0
    %v683 = vadd.f32 %v636, %v682
    %684 = vmatmul.f32.gmra.mxu0 %v43
    %v685 = vpop.f32.mrf.mxu0
    %v686 = vadd.f32 %v636, %v685
    %687 = vmatmul.f32.gmra.mxu0 %v44
    %v688 = vpop.f32.mrf.mxu0
    %v689 = vadd.f32 %v636, %v688
    %690 = vmatmul.f32.gmra.mxu0 %v45
    %v691 = vpop.f32.mrf.mxu0
    %v692 = vadd.f32 %v636, %v691
    %693 = vmatmul.f32.gmra.mxu0 %v46
    %v694 = vpop.f32.mrf.mxu0
    %v695 = vadd.f32 %v636, %v694
    %696 = vmatmul.f32.gmra.mxu0 %v47
    %v697 = vpop.f32.mrf.mxu0
    %v698 = vadd.f32 %v636, %v697
    %699 = vmatmul.f32.gmra.mxu0 %v48
    %v700 = vpop.f32.mrf.mxu0
    %v701 = vadd.f32 %v636, %v700
    %702 = vdwg.mxu0
    %v703 = vmax.f32 %v656, 0.0
    %v704 = vmax.f32 %v659, 0.0
    %v705 = vmax.f32 %v662, 0.0
    %v706 = vmax.f32 %v665, 0.0
    %v707 = vmax.f32 %v668, 0.0
    %v708 = vmax.f32 %v671, 0.0
    %v709 = vmax.f32 %v674, 0.0
    %v710 = vmax.f32 %v677, 0.0
    %v711 = vmax.f32 %v680, 0.0
    %v712 = vmax.f32 %v683, 0.0
    %v713 = vmax.f32 %v686, 0.0
    %v714 = vmax.f32 %v689, 0.0
    %v715 = vmax.f32 %v692, 0.0
    %v716 = vmax.f32 %v695, 0.0
    %v717 = vmax.f32 %v698, 0.0
    %v718 = vmax.f32 %v701, 0.0
    %s719 = scalar_lea.vmem [#allocation2], 512
    %v720 = vld [vmem:[%s719] sm:$0xff]
    %v721 = vld [vmem:[%s719 + $0x8] sm:$0xff]
    %v722 = vld [vmem:[%s719 + $0x10] sm:$0xff]
    %v723 = vld [vmem:[%s719 + $0x18] sm:$0xff]
    %v724 = vld [vmem:[%s719 + $0x20] sm:$0xff]
    %v725 = vld [vmem:[%s719 + $0x28] sm:$0xff]
    %v726 = vld [vmem:[%s719 + $0x30] sm:$0xff]
    %v727 = vld [vmem:[%s719 + $0x38] sm:$0xff]
    %v728 = vld [vmem:[%s719 + $0x40] sm:$0xff]
    %v729 = vld [vmem:[%s719 + $0x48] sm:$0xff]
    %v730 = vld [vmem:[%s719 + $0x50] sm:$0xff]
    %v731 = vld [vmem:[%s719 + $0x58] sm:$0xff]
    %v732 = vld [vmem:[%s719 + $0x60] sm:$0xff]
    %v733 = vld [vmem:[%s719 + $0x68] sm:$0xff]
    %v734 = vld [vmem:[%s719 + $0x70] sm:$0xff]
    %v735 = vld [vmem:[%s719 + $0x78] sm:$0xff]
    %736 = vmatpush.msra.mxu0 %v735
    %737 = vmatpush.msra.mxu0 %v734
    %738 = vmatpush.msra.mxu0 %v733
    %739 = vmatpush.msra.mxu0 %v732
    %740 = vmatpush.msra.mxu0 %v731
    %741 = vmatpush.msra.mxu0 %v730
    %742 = vmatpush.msra.mxu0 %v729
    %743 = vmatpush.msra.mxu0 %v728
    %744 = vmatpush.msra.mxu0 %v727
    %745 = vmatpush.msra.mxu0 %v726
    %746 = vmatpush.msra.mxu0 %v725
    %747 = vmatpush.msra.mxu0 %v724
    %748 = vmatpush.msra.mxu0 %v723
    %749 = vmatpush.msra.mxu0 %v722
    %750 = vmatpush.msra.mxu0 %v721
    %751 = vmatpush.msra.mxu0 %v720
    %752 = vmatmul.f32.gmra.mxu0 %v703
    %v753 = vpop.f32.mrf.mxu0
    %v754 = vadd.f32 0.0, %v753
    %755 = vmatmul.f32.gmra.mxu0 %v704
    %v756 = vpop.f32.mrf.mxu0
    %v757 = vadd.f32 0.0, %v756
    %758 = vmatmul.f32.gmra.mxu0 %v705
    %v759 = vpop.f32.mrf.mxu0
    %v760 = vadd.f32 0.0, %v759
    %761 = vmatmul.f32.gmra.mxu0 %v706
    %v762 = vpop.f32.mrf.mxu0
    %v763 = vadd.f32 0.0, %v762
    %764 = vmatmul.f32.gmra.mxu0 %v707
    %v765 = vpop.f32.mrf.mxu0
    %v766 = vadd.f32 0.0, %v765
    %767 = vmatmul.f32.gmra.mxu0 %v708
    %v768 = vpop.f32.mrf.mxu0
    %v769 = vadd.f32 0.0, %v768
    %770 = vmatmul.f32.gmra.mxu0 %v709
    %v771 = vpop.f32.mrf.mxu0
    %v772 = vadd.f32 0.0, %v771
    %773 = vmatmul.f32.gmra.mxu0 %v710
    %v774 = vpop.f32.mrf.mxu0
    %v775 = vadd.f32 0.0, %v774
    %776 = vmatmul.f32.gmra.mxu0 %v711
    %v777 = vpop.f32.mrf.mxu0
    %v778 = vadd.f32 0.0, %v777
    %779 = vmatmul.f32.gmra.mxu0 %v712
    %v780 = vpop.f32.mrf.mxu0
    %v781 = vadd.f32 0.0, %v780
    %782 = vmatmul.f32.gmra.mxu0 %v713
    %v783 = vpop.f32.mrf.mxu0
    %v784 = vadd.f32 0.0, %v783
    %785 = vmatmul.f32.gmra.mxu0 %v714
    %v786 = vpop.f32.mrf.mxu0
    %v787 = vadd.f32 0.0, %v786
    %788 = vmatmul.f32.gmra.mxu0 %v715
    %v789 = vpop.f32.mrf.mxu0
    %v790 = vadd.f32 0.0, %v789
    %791 = vmatmul.f32.gmra.mxu0 %v716
    %v792 = vpop.f32.mrf.mxu0
    %v793 = vadd.f32 0.0, %v792
    %794 = vmatmul.f32.gmra.mxu0 %v717
    %v795 = vpop.f32.mrf.mxu0
    %v796 = vadd.f32 0.0, %v795
    %797 = vmatmul.f32.gmra.mxu0 %v718
    %v798 = vpop.f32.mrf.mxu0
    %v799 = vadd.f32 0.0, %v798
    %800 = vdwg.mxu0
    %s801 = scalar_lea.vmem %s3, 4
    %v802 = vld [vmem:[%s801] sm:$0x1]
    %v804 = vperm.slane %v802, 0
    %806 = vmatpush.msra.mxu0 %v799
    %807 = vmatpush.msra.mxu0 %v796
    %808 = vmatpush.msra.mxu0 %v793
    %809 = vmatpush.msra.mxu0 %v790
    %810 = vmatpush.msra.mxu0 %v787
    %811 = vmatpush.msra.mxu0 %v784
    %812 = vmatpush.msra.mxu0 %v781
    %813 = vmatpush.msra.mxu0 %v778
    %814 = vmatpush.msra.mxu0 %v775
    %815 = vmatpush.msra.mxu0 %v772
    %816 = vmatpush.msra.mxu0 %v769
    %817 = vmatpush.msra.mxu0 %v766
    %818 = vmatpush.msra.mxu0 %v763
    %819 = vmatpush.msra.mxu0 %v760
    %820 = vmatpush.msra.mxu0 %v757
    %821 = vmatpush.msra.mxu0 %v754
    %822 = vmatmul.f32.gmra.mxu0 %v33
    %v823 = vpop.f32.mrf.mxu0
    %v824 = vadd.f32 %v804, %v823
    %825 = vmatmul.f32.gmra.mxu0 %v34
    %v826 = vpop.f32.mrf.mxu0
    %v827 = vadd.f32 %v804, %v826
    %828 = vmatmul.f32.gmra.mxu0 %v35
    %v829 = vpop.f32.mrf.mxu0
    %v830 = vadd.f32 %v804, %v829
    %831 = vmatmul.f32.gmra.mxu0 %v36
    %v832 = vpop.f32.mrf.mxu0
    %v833 = vadd.f32 %v804, %v832
    %834 = vmatmul.f32.gmra.mxu0 %v37
    %v835 = vpop.f32.mrf.mxu0
    %v836 = vadd.f32 %v804, %v835
    %837 = vmatmul.f32.gmra.mxu0 %v38
    %v838 = vpop.f32.mrf.mxu0
    %v839 = vadd.f32 %v804, %v838
    %840 = vmatmul.f32.gmra.mxu0 %v39
    %v841 = vpop.f32.mrf.mxu0
    %v842 = vadd.f32 %v804, %v841
    %843 = vmatmul.f32.gmra.mxu0 %v40
    %v844 = vpop.f32.mrf.mxu0
    %v845 = vadd.f32 %v804, %v844
    %846 = vmatmul.f32.gmra.mxu0 %v41
    %v847 = vpop.f32.mrf.mxu0
    %v848 = vadd.f32 %v804, %v847
    %849 = vmatmul.f32.gmra.mxu0 %v42
    %v850 = vpop.f32.mrf.mxu0
    %v851 = vadd.f32 %v804, %v850
    %852 = vmatmul.f32.gmra.mxu0 %v43
    %v853 = vpop.f32.mrf.mxu0
    %v854 = vadd.f32 %v804, %v853
    %855 = vmatmul.f32.gmra.mxu0 %v44
    %v856 = vpop.f32.mrf.mxu0
    %v857 = vadd.f32 %v804, %v856
    %858 = vmatmul.f32.gmra.mxu0 %v45
    %v859 = vpop.f32.mrf.mxu0
    %v860 = vadd.f32 %v804, %v859
    %861 = vmatmul.f32.gmra.mxu0 %v46
    %v862 = vpop.f32.mrf.mxu0
    %v863 = vadd.f32 %v804, %v862
    %864 = vmatmul.f32.gmra.mxu0 %v47
    %v865 = vpop.f32.mrf.mxu0
    %v866 = vadd.f32 %v804, %v865
    %867 = vmatmul.f32.gmra.mxu0 %v48
    %v868 = vpop.f32.mrf.mxu0
    %v869 = vadd.f32 %v804, %v868
    %870 = vdwg.mxu0
    %v871 = vmax.f32 %v824, 0.0
    %v872 = vmax.f32 %v827, 0.0
    %v873 = vmax.f32 %v830, 0.0
    %v874 = vmax.f32 %v833, 0.0
    %v875 = vmax.f32 %v836, 0.0
    %v876 = vmax.f32 %v839, 0.0
    %v877 = vmax.f32 %v842, 0.0
    %v878 = vmax.f32 %v845, 0.0
    %v879 = vmax.f32 %v848, 0.0
    %v880 = vmax.f32 %v851, 0.0
    %v881 = vmax.f32 %v854, 0.0
    %v882 = vmax.f32 %v857, 0.0
    %v883 = vmax.f32 %v860, 0.0
    %v884 = vmax.f32 %v863, 0.0
    %v885 = vmax.f32 %v866, 0.0
    %v886 = vmax.f32 %v869, 0.0
    %s887 = scalar_lea.vmem [#allocation2], 640
    %v888 = vld [vmem:[%s887] sm:$0xff]
    %v889 = vld [vmem:[%s887 + $0x8] sm:$0xff]
    %v890 = vld [vmem:[%s887 + $0x10] sm:$0xff]
    %v891 = vld [vmem:[%s887 + $0x18] sm:$0xff]
    %v892 = vld [vmem:[%s887 + $0x20] sm:$0xff]
    %v893 = vld [vmem:[%s887 + $0x28] sm:$0xff]
    %v894 = vld [vmem:[%s887 + $0x30] sm:$0xff]
    %v895 = vld [vmem:[%s887 + $0x38] sm:$0xff]
    %v896 = vld [vmem:[%s887 + $0x40] sm:$0xff]
    %v897 = vld [vmem:[%s887 + $0x48] sm:$0xff]
    %v898 = vld [vmem:[%s887 + $0x50] sm:$0xff]
    %v899 = vld [vmem:[%s887 + $0x58] sm:$0xff]
    %v900 = vld [vmem:[%s887 + $0x60] sm:$0xff]
    %v901 = vld [vmem:[%s887 + $0x68] sm:$0xff]
    %v902 = vld [vmem:[%s887 + $0x70] sm:$0xff]
    %v903 = vld [vmem:[%s887 + $0x78] sm:$0xff]
    %904 = vmatpush.msra.mxu0 %v903
    %905 = vmatpush.msra.mxu0 %v902
    %906 = vmatpush.msra.mxu0 %v901
    %907 = vmatpush.msra.mxu0 %v900
    %908 = vmatpush.msra.mxu0 %v899
    %909 = vmatpush.msra.mxu0 %v898
    %910 = vmatpush.msra.mxu0 %v897
    %911 = vmatpush.msra.mxu0 %v896
    %912 = vmatpush.msra.mxu0 %v895
    %913 = vmatpush.msra.mxu0 %v894
    %914 = vmatpush.msra.mxu0 %v893
    %915 = vmatpush.msra.mxu0 %v892
    %916 = vmatpush.msra.mxu0 %v891
    %917 = vmatpush.msra.mxu0 %v890
    %918 = vmatpush.msra.mxu0 %v889
    %919 = vmatpush.msra.mxu0 %v888
    %920 = vmatmul.f32.gmra.mxu0 %v871
    %v921 = vpop.f32.mrf.mxu0
    %v922 = vadd.f32 0.0, %v921
    %923 = vmatmul.f32.gmra.mxu0 %v872
    %v924 = vpop.f32.mrf.mxu0
    %v925 = vadd.f32 0.0, %v924
    %926 = vmatmul.f32.gmra.mxu0 %v873
    %v927 = vpop.f32.mrf.mxu0
    %v928 = vadd.f32 0.0, %v927
    %929 = vmatmul.f32.gmra.mxu0 %v874
    %v930 = vpop.f32.mrf.mxu0
    %v931 = vadd.f32 0.0, %v930
    %932 = vmatmul.f32.gmra.mxu0 %v875
    %v933 = vpop.f32.mrf.mxu0
    %v934 = vadd.f32 0.0, %v933
    %935 = vmatmul.f32.gmra.mxu0 %v876
    %v936 = vpop.f32.mrf.mxu0
    %v937 = vadd.f32 0.0, %v936
    %938 = vmatmul.f32.gmra.mxu0 %v877
    %v939 = vpop.f32.mrf.mxu0
    %v940 = vadd.f32 0.0, %v939
    %941 = vmatmul.f32.gmra.mxu0 %v878
    %v942 = vpop.f32.mrf.mxu0
    %v943 = vadd.f32 0.0, %v942
    %944 = vmatmul.f32.gmra.mxu0 %v879
    %v945 = vpop.f32.mrf.mxu0
    %v946 = vadd.f32 0.0, %v945
    %947 = vmatmul.f32.gmra.mxu0 %v880
    %v948 = vpop.f32.mrf.mxu0
    %v949 = vadd.f32 0.0, %v948
    %950 = vmatmul.f32.gmra.mxu0 %v881
    %v951 = vpop.f32.mrf.mxu0
    %v952 = vadd.f32 0.0, %v951
    %953 = vmatmul.f32.gmra.mxu0 %v882
    %v954 = vpop.f32.mrf.mxu0
    %v955 = vadd.f32 0.0, %v954
    %956 = vmatmul.f32.gmra.mxu0 %v883
    %v957 = vpop.f32.mrf.mxu0
    %v958 = vadd.f32 0.0, %v957
    %959 = vmatmul.f32.gmra.mxu0 %v884
    %v960 = vpop.f32.mrf.mxu0
    %v961 = vadd.f32 0.0, %v960
    %962 = vmatmul.f32.gmra.mxu0 %v885
    %v963 = vpop.f32.mrf.mxu0
    %v964 = vadd.f32 0.0, %v963
    %965 = vmatmul.f32.gmra.mxu0 %v886
    %v966 = vpop.f32.mrf.mxu0
    %v967 = vadd.f32 0.0, %v966
    %968 = vdwg.mxu0
    %s969 = scalar_lea.vmem %s3, 5
    %v970 = vld [vmem:[%s969] sm:$0x1]
    %v972 = vperm.slane %v970, 0
    %974 = vmatpush.msra.mxu0 %v967
    %975 = vmatpush.msra.mxu0 %v964
    %976 = vmatpush.msra.mxu0 %v961
    %977 = vmatpush.msra.mxu0 %v958
    %978 = vmatpush.msra.mxu0 %v955
    %979 = vmatpush.msra.mxu0 %v952
    %980 = vmatpush.msra.mxu0 %v949
    %981 = vmatpush.msra.mxu0 %v946
    %982 = vmatpush.msra.mxu0 %v943
    %983 = vmatpush.msra.mxu0 %v940
    %984 = vmatpush.msra.mxu0 %v937
    %985 = vmatpush.msra.mxu0 %v934
    %986 = vmatpush.msra.mxu0 %v931
    %987 = vmatpush.msra.mxu0 %v928
    %988 = vmatpush.msra.mxu0 %v925
    %989 = vmatpush.msra.mxu0 %v922
    %990 = vmatmul.f32.gmra.mxu0 %v33
    %v991 = vpop.f32.mrf.mxu0
    %v992 = vadd.f32 %v972, %v991
    %993 = vmatmul.f32.gmra.mxu0 %v34
    %v994 = vpop.f32.mrf.mxu0
    %v995 = vadd.f32 %v972, %v994
    %996 = vmatmul.f32.gmra.mxu0 %v35
    %v997 = vpop.f32.mrf.mxu0
    %v998 = vadd.f32 %v972, %v997
    %999 = vmatmul.f32.gmra.mxu0 %v36
    %v1000 = vpop.f32.mrf.mxu0
    %v1001 = vadd.f32 %v972, %v1000
    %1002 = vmatmul.f32.gmra.mxu0 %v37
    %v1003 = vpop.f32.mrf.mxu0
    %v1004 = vadd.f32 %v972, %v1003
    %1005 = vmatmul.f32.gmra.mxu0 %v38
    %v1006 = vpop.f32.mrf.mxu0
    %v1007 = vadd.f32 %v972, %v1006
    %1008 = vmatmul.f32.gmra.mxu0 %v39
    %v1009 = vpop.f32.mrf.mxu0
    %v1010 = vadd.f32 %v972, %v1009
    %1011 = vmatmul.f32.gmra.mxu0 %v40
    %v1012 = vpop.f32.mrf.mxu0
    %v1013 = vadd.f32 %v972, %v1012
    %1014 = vmatmul.f32.gmra.mxu0 %v41
    %v1015 = vpop.f32.mrf.mxu0
    %v1016 = vadd.f32 %v972, %v1015
    %1017 = vmatmul.f32.gmra.mxu0 %v42
    %v1018 = vpop.f32.mrf.mxu0
    %v1019 = vadd.f32 %v972, %v1018
    %1020 = vmatmul.f32.gmra.mxu0 %v43
    %v1021 = vpop.f32.mrf.mxu0
    %v1022 = vadd.f32 %v972, %v1021
    %1023 = vmatmul.f32.gmra.mxu0 %v44
    %v1024 = vpop.f32.mrf.mxu0
    %v1025 = vadd.f32 %v972, %v1024
    %1026 = vmatmul.f32.gmra.mxu0 %v45
    %v1027 = vpop.f32.mrf.mxu0
    %v1028 = vadd.f32 %v972, %v1027
    %1029 = vmatmul.f32.gmra.mxu0 %v46
    %v1030 = vpop.f32.mrf.mxu0
    %v1031 = vadd.f32 %v972, %v1030
    %1032 = vmatmul.f32.gmra.mxu0 %v47
    %v1033 = vpop.f32.mrf.mxu0
    %v1034 = vadd.f32 %v972, %v1033
    %1035 = vmatmul.f32.gmra.mxu0 %v48
    %v1036 = vpop.f32.mrf.mxu0
    %v1037 = vadd.f32 %v972, %v1036
    %1038 = vdwg.mxu0
    %1039 = vst [vmem:[%s4] sm:$0xff] %v992
    %1040 = vst [vmem:[%s4 + $0x8] sm:$0xff] %v995
    %1041 = vst [vmem:[%s4 + $0x10] sm:$0xff] %v998
    %1042 = vst [vmem:[%s4 + $0x18] sm:$0xff] %v1001
    %1043 = vst [vmem:[%s4 + $0x20] sm:$0xff] %v1004
    %1044 = vst [vmem:[%s4 + $0x28] sm:$0xff] %v1007
    %1045 = vst [vmem:[%s4 + $0x30] sm:$0xff] %v1010
    %1046 = vst [vmem:[%s4 + $0x38] sm:$0xff] %v1013
    %1047 = vst [vmem:[%s4 + $0x40] sm:$0xff] %v1016
    %1048 = vst [vmem:[%s4 + $0x48] sm:$0xff] %v1019
    %1049 = vst [vmem:[%s4 + $0x50] sm:$0xff] %v1022
    %1050 = vst [vmem:[%s4 + $0x58] sm:$0xff] %v1025
    %1051 = vst [vmem:[%s4 + $0x60] sm:$0xff] %v1028
    %1052 = vst [vmem:[%s4 + $0x68] sm:$0xff] %v1031
    %1053 = vst [vmem:[%s4 + $0x70] sm:$0xff] %v1034
    %1054 = vst [vmem:[%s4 + $0x78] sm:$0xff] %v1037
    // Predicated region
    $region22: #{forward.1} parent=1 // pred_check
      _
    $region23: #{forward.1} parent=1 // pred_check_branch
      %1056 = sbr.rel (0) target = $region25
    $region24: #{forward.1} parent=1 // pred_region
      _
    $region25: #{forward.1} parent=1 // pred_fallthru
      _
    // Predicated region
    $region26: #{forward.1} parent=1 // pred_check
      _
    $region27: #{forward.1} parent=1 // pred_check_branch
      %1058 = sbr.rel (0) target = $region29
    $region28: #{forward.1} parent=1 // pred_region
      _
    $region29: #{forward.1} parent=1 // pred_fallthru
      _
    %1059 = vsyncpa [#allocation3], 1

</llo_original>
